<compile_context>
chip_gen: v6e
topology: v6e:2x2x1
jax: 0.10.0
libtpu: 0.0.40
codegen_flags: <defaults>
</compile_context>

<pallas_src>
import jax
import jax.numpy as jnp
from jax.experimental import pallas as pl
from jax.experimental.pallas import tpu as pltpu

_LANES = 128                      # lane width of the flattened slab's last dim
_TARGET_BLOCK_BYTES = 2 << 20     # ~2 MiB per block (constant bytes across dtypes)
_MIN_SPLIT_BYTES = 1 << 20        # only split a 1-step grid if halves stay >= 512 KiB
_MIN_BUFFERED_BYTES = 1 << 20     # extra pipeline buffer only pays off on >= 1 MiB blocks


def _copy_kernel(x_ref, o_ref):
    # DiffusionWrapper.forward() is a no-op; this identity tile copy exists
    # only to exercise the Pallas/TPU plumbing on the debug path.
    o_ref[...] = x_ref[...]


def _round_up(v, m):
    return ((v + m - 1) // m) * m


def _pick_block_rows(rows, itemsize):
    """Dtype-aware row tiling for a lane-dense [rows, 128] slab."""
    # Constant block *bytes* across dtypes: f32 -> 4096 rows, bf16 -> 8192,
    # int8/fp8 -> 16384.  All caps are multiples of the packed sublane counts
    # (8 / 16 / 32), so layout legality is preserved.
    cap = max(8, _TARGET_BLOCK_BYTES // (_LANES * itemsize))
    row_bytes = _LANES * itemsize

    if rows <= cap:
        # Whole slab fits in one block.  A 1-step "parallel" grid serializes
        # onto one of v7x's 2 TensorCores, so split big-enough tensors into two
        # tiles (halves >= 512 KiB keep the copy bandwidth-bound); tiny tensors
        # stay full-extent (always layout-legal, even if rows < 8).
        if rows * row_bytes >= _MIN_SPLIT_BYTES and rows >= 16:
            return _round_up(pl.cdiv(rows, 2), 8)
        return rows

    # Prefer the largest multiple of 8 <= cap that divides rows exactly, so the
    # final grid step is not a masked partial block; fall back to the cap.
    for cand in range(cap - cap % 8, 7, -8):
        if rows % cand == 0:
            return cand
    return cap


def identity_passthrough(x: jax.Array, *, debug_pallas_copy: bool = False) -> jax.Array:
    """Identity over a tensor.

    Production path: return `x` untouched — zero HBM traffic, zero kernels.
    Debug path (`debug_pallas_copy=True`): run a tiled, pipelined Pallas copy
    to exercise the TPU plumbing end-to-end.
    """
    if not debug_pallas_copy:
        return x

    total = x.size
    if total == 0 or total % _LANES != 0:
        # Identity is identity: shapes that can't be made lane-dense pay nothing.
        return x

    rows = total // _LANES
    # NOTE: reshaping an NCHW tensor with W < 128 into a lane-dense slab is a
    # real XLA relayout (>= 1x tensor bytes), not a free view.  Acceptable here
    # because this path is test/debug-only and never runs in production.
    flat = x.reshape(rows, _LANES)

    itemsize = jnp.dtype(x.dtype).itemsize
    block_rows = _pick_block_rows(rows, itemsize)
    steps = pl.cdiv(rows, block_rows)
    block_bytes = block_rows * _LANES * itemsize

    # Streaming copy has ~zero compute, so DMA issue/writeback jitter is fully
    # exposed; a third input buffer hides it once blocks are big enough.
    # Worst-case VMEM: 3 in + 2 out buffers at 2 MiB = 10 MiB, well under the
    # 32 MiB scoped-VMEM default on every generation (v7x physical is 64 MiB).
    in_spec_kwargs = {}
    if block_bytes >= _MIN_BUFFERED_BYTES and steps >= 3:
        in_spec_kwargs["pipeline_mode"] = pl.Buffered(3)

    out = pl.pallas_call(
        _copy_kernel,
        out_shape=jax.ShapeDtypeStruct((rows, _LANES), x.dtype),
        grid=(steps,),
        in_specs=[pl.BlockSpec((block_rows, _LANES), lambda i: (i, 0), **in_spec_kwargs)],
        out_specs=pl.BlockSpec((block_rows, _LANES), lambda i: (i, 0)),
        # No input_output_aliases: callers here reuse `x` afterwards, so the
        # runtime would have to insert a defensive copy before aliasing,
        # *adding* a hidden full read+write of HBM traffic.
        compiler_params=pltpu.CompilerParams(
            dimension_semantics=("parallel",)),  # shards row tiles across v7x's 2 TCs
    )(flat)
    return out.reshape(x.shape)


class DiffusionWrapper:
    """JAX/Pallas port of the (empty) PyTorch DiffusionWrapper base class."""

    def __init__(self):
        # Original __init__ registers no parameters.
        pass

    def set_target(self, target):
        # TODO(synk): abstract hook in the PyTorch base class; no compute to port.
        pass

    def sample(self, image, start_step, stop_step, step_size):
        # Original method is `pass` -> returns None, no compute, no kernels.
        return None

    def forward(self):
        # Original forward is `pass` -> returns None, no tensors touched.
        return None

    __call__ = forward


if __name__ == "__main__":
    key = jax.random.PRNGKey(0)

    wrapper = DiffusionWrapper()
    wrapper.set_target(None)

    # Forward-pass semantics of the original module: returns None, no compute.
    image = jax.random.normal(key, (2, 4, 16, 16), dtype=jnp.float32)
    assert wrapper() is None
    assert wrapper.sample(image, start_step=0, stop_step=8, step_size=1) is None

    # Production identity path: no kernel, no HBM traffic, same array back.
    assert identity_passthrough(image) is image

    # Debug/test path: exercise the Pallas copy kernel across shapes/dtypes:
    #  - tiny f32: 1-step full-extent block
    #  - 1 MiB bf16: split into two tiles (>=2 grid steps for v7x's 2 TCs)
    #  - 6 MiB f32: 3 steps of 2 MiB blocks, exact divisor, Buffered(3) input
    k1, k2, k3 = jax.random.split(key, 3)
    tests = [
        jax.random.normal(k1, (2, 4, 16, 16), dtype=jnp.float32),
        jax.random.normal(k2, (2, 4, 512, 128), dtype=jnp.float32).astype(jnp.bfloat16),
        jax.random.normal(k3, (6, 4, 256, 256), dtype=jnp.float32),
    ]
    for t in tests:
        y = identity_passthrough(t, debug_pallas_copy=True)
        jax.block_until_ready(y)
        assert y.shape == t.shape and y.dtype == t.dtype
        assert bool(jnp.array_equal(y, t))

    print("KERNEL_OK")
</pallas_src>

<mosaic_0001>
module attributes {stable_mosaic.version = 11 : i64} {
  func.func @_copy_kernel(%arg0: i32, %arg1: memref<16x128xf32, #tpu.memory_space<vmem>>, %arg2: memref<16x128xf32, #tpu.memory_space<vmem>>) attributes {dimension_semantics = [#tpu.dimension_semantics<parallel>], iteration_bounds = array<i64: 1>, scalar_prefetch = 0 : i64, scratch_operands = 0 : i64, tpu.core_type = #tpu.core_type<tc>, window_params = [{transform_indices = @transform_0, window_bounds = array<i64: 16, 128>}, {transform_indices = @transform_1, window_bounds = array<i64: 16, 128>}]} {
    %c0 = arith.constant 0 : index
    %c0_0 = arith.constant 0 : index
    %0 = vector.load %arg1[%c0, %c0_0] : memref<16x128xf32, #tpu.memory_space<vmem>>, vector<16x128xf32>
    %c0_1 = arith.constant 0 : index
    %c0_2 = arith.constant 0 : index
    %1 = vector.load %arg2[%c0_1, %c0_2] : memref<16x128xf32, #tpu.memory_space<vmem>>, vector<16x128xf32>
    tpu.vector_store %arg2[%c0_1, %c0_2], %0 {strides = array<i32>} : memref<16x128xf32, #tpu.memory_space<vmem>>, vector<16x128xf32>,
    return
  }
  func.func @transform_0(%arg0: i32) -> (i32, i32) {
    %c0_i32 = arith.constant 0 : i32
    %c0_i32_0 = arith.constant 0 : i32
    return %arg0, %c0_i32 : i32, i32
  }
  func.func @transform_1(%arg0: i32) -> (i32, i32) {
    %c0_i32 = arith.constant 0 : i32
    %c0_i32_0 = arith.constant 0 : i32
    return %arg0, %c0_i32 : i32, i32
  }
}

</mosaic_0001>

<llo_original>
// kernel: tpu_custom_call.1
$region0: #{tpu_custom_call.1}
  #allocation0 [shape = 'u32[]', space=smem, size = 0x4, offset = 0x4, fixed_abs, tag = 'smem constant byte address 0x4 - core index']
  #allocation1 [shape = 'u32[144,128]{1,0:T(1,128)}', space=vmem, size = 0x12000, scoped, tag = 'internal scratch']
  %s0 = inlined_call_operand.hbm [shape: f32[16,128], index: 0, kind: input, shape index: {}]
  %s1 = inlined_call_operand.hbm [shape: f32[16,128], index: 1, kind: output, shape index: {}]
  %s2 = sld [smem:[#allocation0]]
  $region18: #{tpu_custom_call.1} parent=0
    _
  %s4 = ssub.s32 1, %s2
  %s5 = scalar_select 0, %s4, %s2
  $region1: #{tpu_custom_call.1} parent=0
    #allocation2 [shape = 'u8[8192]{0}', space=vmem, size = 0x2000, scoped, tag = 'input window, operand 0, single buffered']
    #allocation3 [shape = 's32[1]{0}', space=sflag, size = 0x4, scoped, tag = 'scoped memory for tpu_custom_call.1']
    #allocation4 [shape = 's32[1]{0}', space=sflag, size = 0x4, scoped, tag = 'scoped memory for tpu_custom_call.1']
    #allocation5 [shape = 'u8[8192]{0}', space=vmem, size = 0x2000, scoped, tag = 'output window, operand 0, single buffered']
    %6 = vsyncpa [#allocation3], 0
    %7 = vsyncpa [#allocation4], 0
    // Predicated region
    $region2: #{tpu_custom_call.1} parent=1 // pred_check
      _
    $region3: #{tpu_custom_call.1} parent=1 // pred_check_branch
      %9 = sbr.rel (0) target = $region5
    $region4: #{tpu_custom_call.1} parent=1 // pred_region
      %s11 = ssub.s32 256, 256
      %12 = vsyncadd [#allocation3], %s11
      %s13 = sshll.u32 [#allocation2], 4
      %s14 = int_to_ptr.vmem [resolvable:$true] %s13
      %19 = dma.hbm_to_vmem [thread:$0]  %s0, 256, %s14, [#allocation3], 128, 128, 8
    $region5: #{tpu_custom_call.1} parent=1 // pred_fallthru
      _
    // Predicated region
    $region6: #{tpu_custom_call.1} parent=1 // pred_check
      _
    $region7: #{tpu_custom_call.1} parent=1 // pred_check_branch
      %21 = sbr.rel (0) target = $region9
    $region8: #{tpu_custom_call.1} parent=1 // pred_region
      %22 = dma.done [#allocation3], 256
    $region9: #{tpu_custom_call.1} parent=1 // pred_fallthru
      _
    %v23 = vld [vmem:[#allocation2] sm:$0xff]
    %v24 = vld [vmem:[#allocation2 + $0x8] sm:$0xff]
    %25 = vst [vmem:[#allocation5] sm:$0xff] %v23
    %26 = vst [vmem:[#allocation5 + $0x8] sm:$0xff] %v24
    // Predicated region
    $region10: #{tpu_custom_call.1} parent=1 // pred_check
      _
    $region11: #{tpu_custom_call.1} parent=1 // pred_check_branch
      %28 = sbr.rel (0) target = $region13
    $region12: #{tpu_custom_call.1} parent=1 // pred_region
      %s30 = ssub.s32 256, 256
      %31 = vsyncadd [#allocation4], %s30
      %s32 = sshll.u32 [#allocation5], 4
      %s33 = int_to_ptr.vmem [resolvable:$true] %s32
      %38 = dma.vmem_to_hbm [thread:$0]  %s33, 256, %s1, [#allocation4], 128, 128, 8
    $region13: #{tpu_custom_call.1} parent=1 // pred_fallthru
      _
    // Predicated region
    $region14: #{tpu_custom_call.1} parent=1 // pred_check
      _
    $region15: #{tpu_custom_call.1} parent=1 // pred_check_branch
      %40 = sbr.rel (0) target = $region17
    $region16: #{tpu_custom_call.1} parent=1 // pred_region
      %41 = dma.done [#allocation4], 256
    $region17: #{tpu_custom_call.1} parent=1 // pred_fallthru
      _
    %42 = vsyncpa [#allocation3], 1
    %43 = vsyncpa [#allocation4], 1

</llo_original>
